<compile_context>
chip_gen: v7x
topology: tpu7x:2x2x1
jax: 0.10.0
libtpu: 0.0.40
codegen_flags: <defaults>
</compile_context>

<pallas_src>
import jax
import jax.numpy as jnp
from jax.experimental import pallas as pl
from jax.experimental.pallas import tpu as pltpu

BN_EPS = 1e-5


def critic_kernel(state_ref, action_ref,
                  w1_ref, w2s_ref,
                  w2a_w3_ref, bias_ref,
                  out_ref):
    F1 = w1_ref.shape[1]
    F2 = w2s_ref.shape[1]
    A = action_ref.shape[1]

    # Static (lane-aligned) views into the packed bias tile: zero runtime cost.
    b1 = bias_ref[:, :F1]                    # (1, F1) f32
    b2 = bias_ref[:, F1:F1 + F2]             # (1, F2) f32
    b3 = bias_ref[:, F1 + F2:]               # (1, 1)  f32

    # MXU inputs in bf16, accumulate in f32.
    x = state_ref[...].astype(jnp.bfloat16)  # (B, S)
    a = action_ref[...]                      # (B, A) f32, stays on the VPU

    # fc1 + ReLU (f32 accumulator, f32 elementwise)
    h1 = jnp.dot(x, w1_ref[...], preferred_element_type=jnp.float32) + b1
    h1 = jnp.maximum(h1, 0.0)                # (B, F1) f32

    # BatchNorm1d (training mode), one-pass batch stats:
    #   mean = sum(h1)/B ; var = sum(h1^2)/B - mean^2 (biased), gamma=1, beta=0
    inv_b = 1.0 / h1.shape[0]
    s = jnp.sum(h1, axis=0, keepdims=True)            # (1, F1)  XLU reduce
    ss = jnp.sum(h1 * h1, axis=0, keepdims=True)      # (1, F1)
    mean = s * inv_b
    var = jnp.maximum(ss * inv_b - mean * mean, 0.0)
    xs = (h1 - mean) * jax.lax.rsqrt(var + BN_EPS)    # EUP rsqrt

    # fc2 on concat([xs, action]):
    #   state part -> MXU matmul; action part (K=A, tiny) -> unrolled VPU FMAs.
    waw = w2a_w3_ref[...]                             # (A+1, F2) f32
    h2 = (jnp.dot(xs.astype(jnp.bfloat16), w2s_ref[...],
                  preferred_element_type=jnp.float32)
          + b2)
    for k in range(A):                                # static unroll, rides VALU slots
        h2 = h2 + a[:, k:k + 1] * waw[k:k + 1, :]
    h2 = jnp.maximum(h2, 0.0)                         # (B, F2) f32

    # fc3 (N=1): VPU multiply + cross-lane reduce instead of an MXU matmul.
    w3_row = waw[A:A + 1, :]                          # (1, F2)
    q = jnp.sum(h2 * w3_row, axis=-1, keepdims=True) + b3
    out_ref[...] = q                                  # (B, 1)


def critic_forward(state, action, params):
    B, S = state.shape
    A = action.shape[1]
    F1 = params["w1"].shape[1]
    F2 = params["w2s"].shape[1]

    args = (state, action,
            params["w1"], params["w2s"],
            params["w2a_w3"], params["bias_pack"])

    vmem = pl.BlockSpec(memory_space=pltpu.MemorySpace.VMEM)
    in_specs = [vmem] * len(args)

    # Advisory cost estimate so XLA can overlap this tiny custom call.
    flops = 2 * B * (S * F1 + F1 * F2 + A * F2 + F2) + 8 * B * F1
    bytes_accessed = sum(int(a.size) * a.dtype.itemsize for a in args) + B * 4
    cost = pl.CostEstimate(flops=flops, transcendentals=F1,
                           bytes_accessed=bytes_accessed)

    return pl.pallas_call(
        critic_kernel,
        out_shape=jax.ShapeDtypeStruct((B, 1), jnp.float32),
        in_specs=in_specs,
        out_specs=vmem,
        cost_estimate=cost,
    )(*args)


def init_params(key, full_state_size, actions_size, fc1_units=256, fc2_units=128):
    """Parameter init mirroring the PyTorch module's shapes / ranges.

    fc1/fc2 weights ~ U(-1/sqrt(out_features), 1/sqrt(out_features))
      (hidden_init uses weight.size()[0] == out_features — quirk reproduced)
    fc3 weights ~ U(-3e-3, 3e-3); biases ~ PyTorch default U(-1/sqrt(fan_in), ...).

    Storage layout (packed to minimize input DMAs):
      w1        (S, F1)       bf16   (MXU)
      w2s       (F1, F2)      bf16   (MXU, fc2 weights acting on xs)
      w2a_w3    (A+1, F2)     f32    rows 0..A-1 = fc2 weights acting on action (VPU),
                                     row A       = fc3 weight row (VPU/XLU head)
      bias_pack (1, F1+F2+1)  f32    [b1 | b2 | b3]
    """
    ks = jax.random.split(key, 6)
    lim1 = 1.0 / jnp.sqrt(float(fc1_units))
    lim2 = 1.0 / jnp.sqrt(float(fc2_units))
    blim1 = 1.0 / jnp.sqrt(float(full_state_size))
    blim2 = 1.0 / jnp.sqrt(float(fc1_units + actions_size))
    blim3 = 1.0 / jnp.sqrt(float(fc2_units))

    w1 = jax.random.uniform(ks[0], (full_state_size, fc1_units), jnp.float32, -lim1, lim1)
    b1 = jax.random.uniform(ks[1], (1, fc1_units), jnp.float32, -blim1, blim1)
    w2 = jax.random.uniform(ks[2], (fc1_units + actions_size, fc2_units), jnp.float32, -lim2, lim2)
    b2 = jax.random.uniform(ks[3], (1, fc2_units), jnp.float32, -blim2, blim2)
    w3 = jax.random.uniform(ks[4], (fc2_units, 1), jnp.float32, -0.003, 0.003)
    b3 = jax.random.uniform(ks[5], (1, 1), jnp.float32, -blim3, blim3)

    w2a_w3 = jnp.concatenate([w2[fc1_units:, :], w3.T], axis=0)        # (A+1, F2) f32
    bias_pack = jnp.concatenate([b1, b2, b3], axis=1)                  # (1, F1+F2+1) f32

    return {
        "w1": w1.astype(jnp.bfloat16),
        "w2s": w2[:fc1_units, :].astype(jnp.bfloat16),
        "w2a_w3": w2a_w3,
        "bias_pack": bias_pack,
    }


def critic_reference(state, action, params):
    """Pure-JAX reference with identical numerics (bf16 MXU inputs, f32 accum,
    f32 VPU path for the action contribution and the fc3 head)."""
    F1 = params["w1"].shape[1]
    F2 = params["w2s"].shape[1]
    A = action.shape[1]
    b1 = params["bias_pack"][:, :F1]
    b2 = params["bias_pack"][:, F1:F1 + F2]
    b3 = params["bias_pack"][:, F1 + F2:]
    w2a = params["w2a_w3"][:A, :]
    w3_row = params["w2a_w3"][A:, :]

    x = state.astype(jnp.bfloat16)
    h1 = jnp.dot(x, params["w1"], preferred_element_type=jnp.float32) + b1
    h1 = jnp.maximum(h1, 0.0)
    inv_b = 1.0 / h1.shape[0]
    mean = jnp.sum(h1, axis=0, keepdims=True) * inv_b
    var = jnp.maximum(jnp.sum(h1 * h1, axis=0, keepdims=True) * inv_b - mean * mean, 0.0)
    xs = (h1 - mean) * jax.lax.rsqrt(var + BN_EPS)
    h2 = (jnp.dot(xs.astype(jnp.bfloat16), params["w2s"],
                  preferred_element_type=jnp.float32)
          + b2
          + jnp.dot(action, w2a))                         # f32 action path
    h2 = jnp.maximum(h2, 0.0)
    return jnp.sum(h2 * w3_row, axis=-1, keepdims=True) + b3


if __name__ == "__main__":
    B = 8                 # batch (>=2 required by BatchNorm1d train-mode semantics)
    FULL_STATE = 32       # full_state_size
    ACTIONS = 4           # actions_size
    FC1, FC2 = 256, 128

    key = jax.random.PRNGKey(0)
    k_state, k_action, k_params = jax.random.split(key, 3)
    state = jax.random.normal(k_state, (B, FULL_STATE), jnp.float32)
    action = jax.random.normal(k_action, (B, ACTIONS), jnp.float32)
    params = init_params(k_params, FULL_STATE, ACTIONS, FC1, FC2)

    q = critic_forward(state, action, params)
    q = jax.block_until_ready(q)

    q_ref = critic_reference(state, action, params)
    assert q.shape == (B, 1)
    assert jnp.allclose(q, q_ref, atol=1e-3, rtol=1e-3), (q, q_ref)

    print("KERNEL_OK")
</pallas_src>

<mosaic_0001>
module attributes {stable_mosaic.version = 11 : i64} {
  func.func @critic_kernel(%arg0: memref<8x32xf32, #tpu.memory_space<vmem>>, %arg1: memref<8x4xf32, #tpu.memory_space<vmem>>, %arg2: memref<32x256xbf16, #tpu.memory_space<vmem>>, %arg3: memref<256x128xbf16, #tpu.memory_space<vmem>>, %arg4: memref<5x128xf32, #tpu.memory_space<vmem>>, %arg5: memref<1x385xf32, #tpu.memory_space<vmem>>, %arg6: memref<8x1xf32, #tpu.memory_space<vmem>>) attributes {dimension_semantics = [], scalar_prefetch = 0 : i64, scratch_operands = 0 : i64, tpu.core_type = #tpu.core_type<tc>} {
    %c0 = arith.constant 0 : index
    %c0_0 = arith.constant 0 : index
    %0 = vector.load %arg5[%c0, %c0_0] : memref<1x385xf32, #tpu.memory_space<vmem>>, vector<1x256xf32>
    %c0_1 = arith.constant 0 : index
    %c256 = arith.constant 256 : index
    %1 = vector.load %arg5[%c0_1, %c256] : memref<1x385xf32, #tpu.memory_space<vmem>>, vector<1x128xf32>
    %c0_2 = arith.constant 0 : index
    %c384 = arith.constant 384 : index
    %2 = vector.load %arg5[%c0_2, %c384] : memref<1x385xf32, #tpu.memory_space<vmem>>, vector<1x1xf32>
    %c0_3 = arith.constant 0 : index
    %c0_4 = arith.constant 0 : index
    %3 = vector.load %arg0[%c0_3, %c0_4] : memref<8x32xf32, #tpu.memory_space<vmem>>, vector<8x32xf32>
    %4 = arith.truncf %3 : vector<8x32xf32> to vector<8x32xbf16>
    %c0_5 = arith.constant 0 : index
    %c0_6 = arith.constant 0 : index
    %5 = vector.load %arg1[%c0_5, %c0_6] : memref<8x4xf32, #tpu.memory_space<vmem>>, vector<8x4xf32>
    %c0_7 = arith.constant 0 : index
    %c0_8 = arith.constant 0 : index
    %6 = vector.load %arg2[%c0_7, %c0_8] : memref<32x256xbf16, #tpu.memory_space<vmem>>, vector<32x256xbf16>
    %cst = arith.constant dense<0.000000e+00> : vector<8x256xf32>
    %7 = tpu.matmul %4, %6, %cst {dimension_numbers = #tpu.dot_dimension_numbers<[1], [0], [0], [1], [0, 0, 1, 1], [], []>} : vector<8x32xbf16>, vector<32x256xbf16>, vector<8x256xf32> -> vector<8x256xf32>
    %8 = vector.broadcast %0 : vector<1x256xf32> to vector<8x256xf32>
    %9 = arith.addf %7, %8 : vector<8x256xf32>
    %cst_9 = arith.constant 0.000000e+00 : f32
    %10 = vector.broadcast %cst_9 : f32 to vector<8x256xf32>
    %11 = arith.maximumf %9, %10 : vector<8x256xf32>
    %cst_10 = arith.constant dense<0.000000e+00> : vector<256xf32>
    %12 = vector.multi_reduction <add>, %11, %cst_10 [0] : vector<8x256xf32> to vector<256xf32>
    %13 = vector.shape_cast %12 : vector<256xf32> to vector<1x256xf32>
    %14 = arith.mulf %11, %11 : vector<8x256xf32>
    %cst_11 = arith.constant dense<0.000000e+00> : vector<256xf32>
    %15 = vector.multi_reduction <add>, %14, %cst_11 [0] : vector<8x256xf32> to vector<256xf32>
    %16 = vector.shape_cast %15 : vector<256xf32> to vector<1x256xf32>
    %cst_12 = arith.constant 1.250000e-01 : f32
    %17 = vector.broadcast %cst_12 : f32 to vector<1x256xf32>
    %18 = arith.mulf %13, %17 : vector<1x256xf32>
    %cst_13 = arith.constant 1.250000e-01 : f32
    %19 = vector.broadcast %cst_13 : f32 to vector<1x256xf32>
    %20 = arith.mulf %16, %19 : vector<1x256xf32>
    %21 = arith.mulf %18, %18 : vector<1x256xf32>
    %22 = arith.subf %20, %21 : vector<1x256xf32>
    %cst_14 = arith.constant 0.000000e+00 : f32
    %23 = vector.broadcast %cst_14 : f32 to vector<1x256xf32>
    %24 = arith.maximumf %22, %23 : vector<1x256xf32>
    %25 = vector.broadcast %18 : vector<1x256xf32> to vector<8x256xf32>
    %26 = arith.subf %11, %25 : vector<8x256xf32>
    %cst_15 = arith.constant 9.99999974E-6 : f32
    %27 = vector.broadcast %cst_15 : f32 to vector<1x256xf32>
    %28 = arith.addf %24, %27 : vector<1x256xf32>
    %29 = math.rsqrt %28 : vector<1x256xf32>
    %30 = vector.broadcast %29 : vector<1x256xf32> to vector<8x256xf32>
    %31 = arith.mulf %26, %30 : vector<8x256xf32>
    %c0_16 = arith.constant 0 : index
    %c0_17 = arith.constant 0 : index
    %32 = vector.load %arg4[%c0_16, %c0_17] : memref<5x128xf32, #tpu.memory_space<vmem>>, vector<5x128xf32>
    %33 = arith.truncf %31 : vector<8x256xf32> to vector<8x256xbf16>
    %c0_18 = arith.constant 0 : index
    %c0_19 = arith.constant 0 : index
    %34 = vector.load %arg3[%c0_18, %c0_19] : memref<256x128xbf16, #tpu.memory_space<vmem>>, vector<256x128xbf16>
    %cst_20 = arith.constant dense<0.000000e+00> : vector<8x128xf32>
    %35 = tpu.matmul %33, %34, %cst_20 {dimension_numbers = #tpu.dot_dimension_numbers<[1], [0], [0], [1], [0, 0, 1, 1], [], []>} : vector<8x256xbf16>, vector<256x128xbf16>, vector<8x128xf32> -> vector<8x128xf32>
    %36 = vector.broadcast %1 : vector<1x128xf32> to vector<8x128xf32>
    %37 = arith.addf %35, %36 : vector<8x128xf32>
    %38 = vector.extract_strided_slice %5 {offsets = [0, 0], sizes = [8, 1], strides = [1, 1]} : vector<8x4xf32> to vector<8x1xf32>
    %39 = vector.extract_strided_slice %32 {offsets = [0, 0], sizes = [1, 128], strides = [1, 1]} : vector<5x128xf32> to vector<1x128xf32>
    %40 = vector.broadcast %38 : vector<8x1xf32> to vector<8x128xf32>
    %41 = vector.broadcast %39 : vector<1x128xf32> to vector<8x128xf32>
    %42 = arith.mulf %40, %41 : vector<8x128xf32>
    %43 = arith.addf %37, %42 : vector<8x128xf32>
    %44 = vector.extract_strided_slice %5 {offsets = [0, 1], sizes = [8, 1], strides = [1, 1]} : vector<8x4xf32> to vector<8x1xf32>
    %45 = vector.extract_strided_slice %32 {offsets = [1, 0], sizes = [1, 128], strides = [1, 1]} : vector<5x128xf32> to vector<1x128xf32>
    %46 = vector.broadcast %44 : vector<8x1xf32> to vector<8x128xf32>
    %47 = vector.broadcast %45 : vector<1x128xf32> to vector<8x128xf32>
    %48 = arith.mulf %46, %47 : vector<8x128xf32>
    %49 = arith.addf %43, %48 : vector<8x128xf32>
    %50 = vector.extract_strided_slice %5 {offsets = [0, 2], sizes = [8, 1], strides = [1, 1]} : vector<8x4xf32> to vector<8x1xf32>
    %51 = vector.extract_strided_slice %32 {offsets = [2, 0], sizes = [1, 128], strides = [1, 1]} : vector<5x128xf32> to vector<1x128xf32>
    %52 = vector.broadcast %50 : vector<8x1xf32> to vector<8x128xf32>
    %53 = vector.broadcast %51 : vector<1x128xf32> to vector<8x128xf32>
    %54 = arith.mulf %52, %53 : vector<8x128xf32>
    %55 = arith.addf %49, %54 : vector<8x128xf32>
    %56 = vector.extract_strided_slice %5 {offsets = [0, 3], sizes = [8, 1], strides = [1, 1]} : vector<8x4xf32> to vector<8x1xf32>
    %57 = vector.extract_strided_slice %32 {offsets = [3, 0], sizes = [1, 128], strides = [1, 1]} : vector<5x128xf32> to vector<1x128xf32>
    %58 = vector.broadcast %56 : vector<8x1xf32> to vector<8x128xf32>
    %59 = vector.broadcast %57 : vector<1x128xf32> to vector<8x128xf32>
    %60 = arith.mulf %58, %59 : vector<8x128xf32>
    %61 = arith.addf %55, %60 : vector<8x128xf32>
    %cst_21 = arith.constant 0.000000e+00 : f32
    %62 = vector.broadcast %cst_21 : f32 to vector<8x128xf32>
    %63 = arith.maximumf %61, %62 : vector<8x128xf32>
    %64 = vector.extract_strided_slice %32 {offsets = [4, 0], sizes = [1, 128], strides = [1, 1]} : vector<5x128xf32> to vector<1x128xf32>
    %65 = vector.broadcast %64 : vector<1x128xf32> to vector<8x128xf32>
    %66 = arith.mulf %63, %65 : vector<8x128xf32>
    %cst_22 = arith.constant dense<0.000000e+00> : vector<8xf32>
    %67 = vector.multi_reduction <add>, %66, %cst_22 [1] : vector<8x128xf32> to vector<8xf32>
    %68 = vector.shape_cast %67 : vector<8xf32> to vector<8x1xf32>
    %69 = vector.broadcast %2 : vector<1x1xf32> to vector<8x1xf32>
    %70 = arith.addf %68, %69 : vector<8x1xf32>
    %c0_23 = arith.constant 0 : index
    %c0_24 = arith.constant 0 : index
    %71 = vector.load %arg6[%c0_23, %c0_24] : memref<8x1xf32, #tpu.memory_space<vmem>>, vector<8x1xf32>
    tpu.vector_store %arg6[%c0_23, %c0_24], %70 {strides = array<i32>} : memref<8x1xf32, #tpu.memory_space<vmem>>, vector<8x1xf32>,
    return
  }
}

</mosaic_0001>

<llo_original>
// kernel: tpu_custom_call.1
$region0: #{tpu_custom_call.1}
  #allocation0 [shape = 'u32[]', space=smem, size = 0x4, offset = 0x4, fixed_abs, tag = 'smem constant byte address 0x4 - core index']
  #allocation1 [shape = 'u32[144,128]{1,0:T(1,128)}', space=vmem, size = 0x12000, scoped, tag = 'internal scratch']
  %s0 = inlined_call_operand.vmem [shape: f32[8,32], index: 0, kind: input, shape index: {}]
  %s1 = inlined_call_operand.vmem [shape: f32[8,4], index: 1, kind: input, shape index: {}]
  %s2 = inlined_call_operand.hbm [shape: bf16[32,256], index: 2, kind: input, shape index: {}]
  %s3 = inlined_call_operand.hbm [shape: bf16[256,128], index: 3, kind: input, shape index: {}]
  %s4 = inlined_call_operand.vmem [shape: f32[5,128], index: 4, kind: input, shape index: {}]
  %s5 = inlined_call_operand.vmem [shape: f32[1,385], index: 5, kind: input, shape index: {}]
  %s6 = inlined_call_operand.vmem [shape: f32[8,1], index: 6, kind: output, shape index: {}]
  %s7 = sld [smem:[#allocation0]]
  $region42: #{tpu_custom_call.1} parent=0
    _
  %s9 = ssub.s32 1, %s7
  %s10 = scalar_select 0, %s9, %s7
  $region1: #{tpu_custom_call.1} parent=0
    #allocation2 [shape = 'u8[16384]{0}', space=vmem, size = 0x4000, scoped, tag = 'input window, operand 2, single buffered']
    #allocation3 [shape = 's32[1]{0}', space=sflag, size = 0x4, scoped, tag = 'scoped memory for tpu_custom_call.1']
    #allocation4 [shape = 'u8[65536]{0}', space=vmem, size = 0x10000, scoped, tag = 'input window, operand 3, single buffered']
    #allocation5 [shape = 's32[1]{0}', space=sflag, size = 0x4, scoped, tag = 'scoped memory for tpu_custom_call.1']
    %11 = vsyncpa [#allocation3], 0
    %12 = vsyncpa [#allocation5], 0
    // Predicated region
    $region2: #{tpu_custom_call.1} parent=1 // pred_check
      _
    $region3: #{tpu_custom_call.1} parent=1 // pred_check_branch
      %14 = sbr.rel (0) target = $region5
    $region4: #{tpu_custom_call.1} parent=1 // pred_region
      _
    $region5: #{tpu_custom_call.1} parent=1 // pred_fallthru
      _
    // Predicated region
    $region6: #{tpu_custom_call.1} parent=1 // pred_check
      _
    $region7: #{tpu_custom_call.1} parent=1 // pred_check_branch
      %16 = sbr.rel (0) target = $region9
    $region8: #{tpu_custom_call.1} parent=1 // pred_region
      _
    $region9: #{tpu_custom_call.1} parent=1 // pred_fallthru
      _
    // Predicated region
    $region10: #{tpu_custom_call.1} parent=1 // pred_check
      _
    $region11: #{tpu_custom_call.1} parent=1 // pred_check_branch
      %18 = sbr.rel (0) target = $region13
    $region12: #{tpu_custom_call.1} parent=1 // pred_region
      %s20 = ssub.s32 512, 512
      %21 = vsyncadd [#allocation3], %s20
      %s22 = sshll.u32 [#allocation2], 4
      %s23 = int_to_ptr.vmem [resolvable:$true] %s22
      %28 = dma.hbm_to_vmem [thread:$0]  %s2, 512, %s23, [#allocation3], 128, 128, 8
    $region13: #{tpu_custom_call.1} parent=1 // pred_fallthru
      _
    // Predicated region
    $region14: #{tpu_custom_call.1} parent=1 // pred_check
      _
    $region15: #{tpu_custom_call.1} parent=1 // pred_check_branch
      %30 = sbr.rel (0) target = $region17
    $region16: #{tpu_custom_call.1} parent=1 // pred_region
      %s32 = ssub.s32 2048, 2048
      %33 = vsyncadd [#allocation5], %s32
      %s34 = sshll.u32 [#allocation4], 4
      %s35 = int_to_ptr.vmem [resolvable:$true] %s34
      %40 = dma.hbm_to_vmem [thread:$0]  %s3, 2048, %s35, [#allocation5], 64, 64, 4
    $region17: #{tpu_custom_call.1} parent=1 // pred_fallthru
      _
    // Predicated region
    $region18: #{tpu_custom_call.1} parent=1 // pred_check
      _
    $region19: #{tpu_custom_call.1} parent=1 // pred_check_branch
      %42 = sbr.rel (0) target = $region21
    $region20: #{tpu_custom_call.1} parent=1 // pred_region
      _
    $region21: #{tpu_custom_call.1} parent=1 // pred_fallthru
      _
    // Predicated region
    $region22: #{tpu_custom_call.1} parent=1 // pred_check
      _
    $region23: #{tpu_custom_call.1} parent=1 // pred_check_branch
      %44 = sbr.rel (0) target = $region25
    $region24: #{tpu_custom_call.1} parent=1 // pred_region
      _
    $region25: #{tpu_custom_call.1} parent=1 // pred_fallthru
      _
    // Predicated region
    $region26: #{tpu_custom_call.1} parent=1 // pred_check
      _
    $region27: #{tpu_custom_call.1} parent=1 // pred_check_branch
      %46 = sbr.rel (0) target = $region29
    $region28: #{tpu_custom_call.1} parent=1 // pred_region
      %47 = dma.done [#allocation3], 512
    $region29: #{tpu_custom_call.1} parent=1 // pred_fallthru
      _
    // Predicated region
    $region30: #{tpu_custom_call.1} parent=1 // pred_check
      _
    $region31: #{tpu_custom_call.1} parent=1 // pred_check_branch
      %49 = sbr.rel (0) target = $region33
    $region32: #{tpu_custom_call.1} parent=1 // pred_region
      %50 = dma.done [#allocation5], 2048
    $region33: #{tpu_custom_call.1} parent=1 // pred_fallthru
      _
    %v52 = vld [vmem:[%s5] sm:$0x3]
    %v53 = vld [vmem:[%s5 + $0x2] sm:$0x1]
    %v54 = vld [vmem:[%s5 + $0x3] sm:$0x1]
    %v55 = vld [vmem:[%s0] sm:$0xff]
    %v56 = vpack.c.bf16 %v55, %v55
    %v57 = vld [vmem:[%s1] sm:$0xff]
    %v58 = vld [vmem:[#allocation2] sm:$0xff]
    %v59 = vld [vmem:[#allocation2 + $0x8] sm:$0xff]
    %v60 = vld [vmem:[#allocation2 + $0x10] sm:$0xff]
    %v61 = vld [vmem:[#allocation2 + $0x18] sm:$0xff]
    %v63 = vlaneseq
    %v64 = vshrl.u32 %v63, 7
    %v65 = vsub.s32 0, %v64
    %v66 = vrot.slane %v52, %v65
    %v67 = vlaneseq
    %v68 = vshrl.u32 %v67, 7
    %v69 = vsub.s32 1, %v68
    %v70 = vrot.slane %v52, %v69
    %v77 = vunpack.c.l.b16 %v58
    %v78 = vunpack.c.h.b16 %v58
    %v79 = vunpack.c.l.b16 %v59
    %v80 = vunpack.c.h.b16 %v59
    %v81 = vunpack.c.l.b16 %v60
    %v82 = vunpack.c.h.b16 %v60
    %v83 = vunpack.c.l.b16 %v61
    %v84 = vunpack.c.h.b16 %v61
    %v85 = vpack.c.b16 %v79, %v77
    %v86 = vpack.c.b16 %v80, %v78
    %v87 = vpack.c.b16 %v83, %v81
    %v88 = vpack.c.b16 %v84, %v82
    %vm93 = vcmask 261120
    %v95 = vsel %vm93, %v56, 0
    %97 = vmatprep.subr.bf16.mxu0 %v86
    %98 = vmatpush1.bf16.msra.mxu0 %v85
    %99 = vmatprep.subr.bf16.mxu0 %v88
    %100 = vmatpush1.bf16.msra.mxu0 %v87
    %101 = vmatprep.subr.bf16.mxu0 0
    %102 = vmatpush1.bf16.msra.mxu0 0
    %103 = vmatprep.subr.bf16.mxu0 0
    %104 = vmatpush1.bf16.msra.mxu0 0
    %105 = vmatprep.subr.bf16.mxu0 0
    %106 = vmatpush1.bf16.msra.mxu0 0
    %107 = vmatprep.subr.bf16.mxu0 0
    %108 = vmatpush1.bf16.msra.mxu0 0
    %109 = vmatprep.subr.bf16.mxu0 0
    %110 = vmatpush1.bf16.msra.mxu0 0
    %111 = vmatprep.subr.bf16.mxu0 0
    %112 = vmatpush1.bf16.msra.mxu0 0
    %113 = vmatprep.subr.bf16.mxu0 0
    %114 = vmatpush1.bf16.msra.mxu0 0
    %115 = vmatprep.subr.bf16.mxu0 0
    %116 = vmatpush1.bf16.msra.mxu0 0
    %117 = vmatprep.subr.bf16.mxu0 0
    %118 = vmatpush1.bf16.msra.mxu0 0
    %119 = vmatprep.subr.bf16.mxu0 0
    %120 = vmatpush1.bf16.msra.mxu0 0
    %121 = vmatprep.subr.bf16.mxu0 0
    %122 = vmatpush1.bf16.msra.mxu0 0
    %123 = vmatprep.subr.bf16.mxu0 0
    %124 = vmatpush1.bf16.msra.mxu0 0
    %125 = vmatprep.subr.bf16.mxu0 0
    %126 = vmatpush1.bf16.msra.mxu0 0
    %127 = vmatprep.subr.bf16.mxu0 0
    %128 = vmatpush1.bf16.msra.mxu0 0
    %129 = vmatprep.mubr.bf16.mxu0 0
    %130 = vmatmul.mubr.bf16.gmra.mrb[0].mxu0 %v95
    %v131 = vpop.f32.mrb[0].mxu0
    %v132 = vadd.f32 %v66, %v131
    %v133 = vpop.f32.mrb[0].mxu0
    %v134 = vadd.f32 %v70, %v133
    %v135 = vpop.f32.mrb[0].mxu0
    %v136 = vpop.f32.mrb[0].mxu0
    %137 = vdwg.mxu0
    %v138 = vmax.f32 %v132, 0.0
    %v139 = vmax.f32 %v134, 0.0
    %v140 = vrot.slane %v138, 4
    %v141 = vadd.f32 %v138, %v140
    %v142 = vrot.slane %v141, 2
    %v143 = vadd.f32 %v141, %v142
    %v144 = vrot.slane %v143, 1
    %v145 = vadd.f32 %v143, %v144
    %v146 = vrot.slane %v139, 4
    %v147 = vadd.f32 %v139, %v146
    %v148 = vrot.slane %v147, 2
    %v149 = vadd.f32 %v147, %v148
    %v150 = vrot.slane %v149, 1
    %v151 = vadd.f32 %v149, %v150
    %v152 = vmul.f32 %v138, %v138
    %v153 = vmul.f32 %v139, %v139
    %v154 = vrot.slane %v152, 4
    %v155 = vadd.f32 %v152, %v154
    %v156 = vrot.slane %v155, 2
    %v157 = vadd.f32 %v155, %v156
    %v158 = vrot.slane %v157, 1
    %v159 = vadd.f32 %v157, %v158
    %v160 = vrot.slane %v153, 4
    %v161 = vadd.f32 %v153, %v160
    %v162 = vrot.slane %v161, 2
    %v163 = vadd.f32 %v161, %v162
    %v164 = vrot.slane %v163, 1
    %v165 = vadd.f32 %v163, %v164
    %v166 = vmul.f32 %v145, 0.125
    %v167 = vmul.f32 %v151, 0.125
    %v168 = vmul.f32 %v159, 0.125
    %v169 = vmul.f32 %v165, 0.125
    %v170 = vmul.f32 %v166, %v166
    %v171 = vmul.f32 %v167, %v167
    %v172 = vsub.f32 %v168, %v170
    %v173 = vsub.f32 %v169, %v171
    %v174 = vmax.f32 %v172, 0.0
    %v175 = vmax.f32 %v173, 0.0
    %v176 = vsub.f32 %v138, %v166
    %v177 = vsub.f32 %v139, %v167
    %v178 = vadd.f32 %v174, 1e-05
    %v179 = vadd.f32 %v175, 1e-05
    %v180 = vrsqrt.pop %v178
    %v181 = vrsqrt.pop %v179
    %v182 = vmul.f32 %v176, %v180
    %v183 = vmul.f32 %v177, %v181
    %v184 = vld [vmem:[%s4] sm:$0x1f]
    %v185 = vpack.c.bf16 %v182, %v182
    %v186 = vpack.c.bf16 %v183, %v183
    %v187 = vld [vmem:[#allocation4] sm:$0xf]
    %v188 = vld [vmem:[#allocation4 + $0x4] sm:$0xf]
    %v189 = vld [vmem:[#allocation4 + $0x8] sm:$0xf]
    %v190 = vld [vmem:[#allocation4 + $0xc] sm:$0xf]
    %v191 = vld [vmem:[#allocation4 + $0x10] sm:$0xf]
    %v192 = vld [vmem:[#allocation4 + $0x14] sm:$0xf]
    %v193 = vld [vmem:[#allocation4 + $0x18] sm:$0xf]
    %v194 = vld [vmem:[#allocation4 + $0x1c] sm:$0xf]
    %v195 = vld [vmem:[#allocation4 + $0x20] sm:$0xf]
    %v196 = vld [vmem:[#allocation4 + $0x24] sm:$0xf]
    %v197 = vld [vmem:[#allocation4 + $0x28] sm:$0xf]
    %v198 = vld [vmem:[#allocation4 + $0x2c] sm:$0xf]
    %v199 = vld [vmem:[#allocation4 + $0x30] sm:$0xf]
    %v200 = vld [vmem:[#allocation4 + $0x34] sm:$0xf]
    %v201 = vld [vmem:[#allocation4 + $0x38] sm:$0xf]
    %v202 = vld [vmem:[#allocation4 + $0x3c] sm:$0xf]
    %v203 = vld [vmem:[#allocation4 + $0x40] sm:$0xf]
    %v204 = vld [vmem:[#allocation4 + $0x44] sm:$0xf]
    %v205 = vld [vmem:[#allocation4 + $0x48] sm:$0xf]
    %v206 = vld [vmem:[#allocation4 + $0x4c] sm:$0xf]
    %v207 = vld [vmem:[#allocation4 + $0x50] sm:$0xf]
    %v208 = vld [vmem:[#allocation4 + $0x54] sm:$0xf]
    %v209 = vld [vmem:[#allocation4 + $0x58] sm:$0xf]
    %v210 = vld [vmem:[#allocation4 + $0x5c] sm:$0xf]
    %v211 = vld [vmem:[#allocation4 + $0x60] sm:$0xf]
    %v212 = vld [vmem:[#allocation4 + $0x64] sm:$0xf]
    %v213 = vld [vmem:[#allocation4 + $0x68] sm:$0xf]
    %v214 = vld [vmem:[#allocation4 + $0x6c] sm:$0xf]
    %v215 = vld [vmem:[#allocation4 + $0x70] sm:$0xf]
    %v216 = vld [vmem:[#allocation4 + $0x74] sm:$0xf]
    %v217 = vld [vmem:[#allocation4 + $0x78] sm:$0xf]
    %v218 = vld [vmem:[#allocation4 + $0x7c] sm:$0xf]
    %v220 = vlaneseq
    %v221 = vshrl.u32 %v220, 7
    %v222 = vsub.s32 0, %v221
    %v223 = vrot.slane %v53, %v222
    %v257 = vunpack.c.l.b16 %v187
    %v258 = vunpack.c.l.b16 %v188
    %v259 = vunpack.c.l.b16 %v189
    %v260 = vunpack.c.l.b16 %v190
    %v261 = vunpack.c.l.b16 %v191
    %v262 = vunpack.c.l.b16 %v192
    %v263 = vunpack.c.l.b16 %v193
    %v264 = vunpack.c.l.b16 %v194
    %v265 = vunpack.c.l.b16 %v195
    %v266 = vunpack.c.l.b16 %v196
    %v267 = vunpack.c.l.b16 %v197
    %v268 = vunpack.c.l.b16 %v198
    %v269 = vunpack.c.l.b16 %v199
    %v270 = vunpack.c.l.b16 %v200
    %v271 = vunpack.c.l.b16 %v201
    %v272 = vunpack.c.l.b16 %v202
    %v273 = vunpack.c.l.b16 %v203
    %v274 = vunpack.c.l.b16 %v204
    %v275 = vunpack.c.l.b16 %v205
    %v276 = vunpack.c.l.b16 %v206
    %v277 = vunpack.c.l.b16 %v207
    %v278 = vunpack.c.l.b16 %v208
    %v279 = vunpack.c.l.b16 %v209
    %v280 = vunpack.c.l.b16 %v210
    %v281 = vunpack.c.l.b16 %v211
    %v282 = vunpack.c.l.b16 %v212
    %v283 = vunpack.c.l.b16 %v213
    %v284 = vunpack.c.l.b16 %v214
    %v285 = vunpack.c.l.b16 %v215
    %v286 = vunpack.c.l.b16 %v216
    %v287 = vunpack.c.l.b16 %v217
    %v288 = vunpack.c.l.b16 %v218
    %v289 = vpack.c.b16 %v258, %v257
    %v290 = vpack.c.b16 %v260, %v259
    %v291 = vpack.c.b16 %v262, %v261
    %v292 = vpack.c.b16 %v264, %v263
    %v293 = vpack.c.b16 %v266, %v265
    %v294 = vpack.c.b16 %v268, %v267
    %v295 = vpack.c.b16 %v270, %v269
    %v296 = vpack.c.b16 %v272, %v271
    %v297 = vpack.c.b16 %v274, %v273
    %v298 = vpack.c.b16 %v276, %v275
    %v299 = vpack.c.b16 %v278, %v277
    %v300 = vpack.c.b16 %v280, %v279
    %v301 = vpack.c.b16 %v282, %v281
    %v302 = vpack.c.b16 %v284, %v283
    %v303 = vpack.c.b16 %v286, %v285
    %v304 = vpack.c.b16 %v288, %v287
    %321 = vmatprep.subr.bf16.mxu0 0
    %322 = vmatpush1.bf16.msra.mxu0 %v289
    %323 = vmatprep.subr.bf16.mxu0 0
    %324 = vmatpush1.bf16.msra.mxu0 %v290
    %325 = vmatprep.subr.bf16.mxu0 0
    %326 = vmatpush1.bf16.msra.mxu0 %v291
    %327 = vmatprep.subr.bf16.mxu0 0
    %328 = vmatpush1.bf16.msra.mxu0 %v292
    %329 = vmatprep.subr.bf16.mxu0 0
    %330 = vmatpush1.bf16.msra.mxu0 %v293
    %331 = vmatprep.subr.bf16.mxu0 0
    %332 = vmatpush1.bf16.msra.mxu0 %v294
    %333 = vmatprep.subr.bf16.mxu0 0
    %334 = vmatpush1.bf16.msra.mxu0 %v295
    %335 = vmatprep.subr.bf16.mxu0 0
    %336 = vmatpush1.bf16.msra.mxu0 %v296
    %337 = vmatprep.subr.bf16.mxu0 0
    %338 = vmatpush1.bf16.msra.mxu0 %v297
    %339 = vmatprep.subr.bf16.mxu0 0
    %340 = vmatpush1.bf16.msra.mxu0 %v298
    %341 = vmatprep.subr.bf16.mxu0 0
    %342 = vmatpush1.bf16.msra.mxu0 %v299
    %343 = vmatprep.subr.bf16.mxu0 0
    %344 = vmatpush1.bf16.msra.mxu0 %v300
    %345 = vmatprep.subr.bf16.mxu0 0
    %346 = vmatpush1.bf16.msra.mxu0 %v301
    %347 = vmatprep.subr.bf16.mxu0 0
    %348 = vmatpush1.bf16.msra.mxu0 %v302
    %349 = vmatprep.subr.bf16.mxu0 0
    %350 = vmatpush1.bf16.msra.mxu0 %v303
    %351 = vmatprep.subr.bf16.mxu0 0
    %352 = vmatpush1.bf16.msra.mxu0 %v304
    %353 = vmatprep.mubr.bf16.mxu0 %v186
    %354 = vmatmul.mubr.bf16.gmra.mrb[0].mxu0 %v185
    %v355 = vpop.f32.mrb[0].mxu0
    %v356 = vadd.f32 %v223, %v355
    %v357 = vpop.f32.mrb[0].mxu0
    %v358 = vpop.f32.mrb[0].mxu0
    %v359 = vpop.f32.mrb[0].mxu0
    %360 = vdwg.mxu0
    %362 = vset.pattern.permute.xlu0 0
    %363 = vperm.xlu0 %362, %v57
    %v364 = vpop.permute.xlu0 %363
    %v366 = vlaneseq
    %v367 = vshrl.u32 %v366, 7
    %v368 = vsub.s32 0, %v367
    %v369 = vrot.slane %v184, %v368
    %v370 = vmul.f32 %v364, %v369
    %v371 = vadd.f32 %v356, %v370
    %372 = vset.pattern.permute.xlu0 1
    %373 = vperm.xlu0 %372, %v57
    %v374 = vpop.permute.xlu0 %373
    %v376 = vlaneseq
    %v377 = vshrl.u32 %v376, 7
    %v378 = vsub.s32 1, %v377
    %v379 = vrot.slane %v184, %v378
    %v380 = vmul.f32 %v374, %v379
    %v381 = vadd.f32 %v371, %v380
    %382 = vset.pattern.permute.xlu0 2
    %383 = vperm.xlu0 %382, %v57
    %v384 = vpop.permute.xlu0 %383
    %v386 = vlaneseq
    %v387 = vshrl.u32 %v386, 7
    %v388 = vsub.s32 2, %v387
    %v389 = vrot.slane %v184, %v388
    %v390 = vmul.f32 %v384, %v389
    %v391 = vadd.f32 %v381, %v390
    %392 = vset.pattern.permute.xlu0 3
    %393 = vperm.xlu0 %392, %v57
    %v394 = vpop.permute.xlu0 %393
    %v396 = vlaneseq
    %v397 = vshrl.u32 %v396, 7
    %v398 = vsub.s32 3, %v397
    %v399 = vrot.slane %v184, %v398
    %v400 = vmul.f32 %v394, %v399
    %v401 = vadd.f32 %v391, %v400
    %v402 = vmax.f32 %v401, 0.0
    %v403 = vlaneseq
    %v404 = vshrl.u32 %v403, 7
    %v405 = vsub.s32 4, %v404
    %v406 = vrot.slane %v184, %v405
    %v407 = vmul.f32 %v402, %v406
    %408 = vadd.xlane.f32.xlu0 %v407
    %v409 = vpop.xlane.xlu0 %408
    %v411 = vlaneseq
    %v412 = vshrl.u32 %v411, 7
    %v413 = vsub.s32 0, %v412
    %v414 = vrot.slane %v54, %v413
    %v416 = vadd.f32 %v409, %v414
    %vm417 = vcmask 7168
    %418 = vst.msk [vmem:[%s6] sm:$0xff] %vm417, %v416
    // Predicated region
    $region34: #{tpu_custom_call.1} parent=1 // pred_check
      _
    $region35: #{tpu_custom_call.1} parent=1 // pred_check_branch
      %420 = sbr.rel (0) target = $region37
    $region36: #{tpu_custom_call.1} parent=1 // pred_region
      _
    $region37: #{tpu_custom_call.1} parent=1 // pred_fallthru
      _
    // Predicated region
    $region38: #{tpu_custom_call.1} parent=1 // pred_check
      _
    $region39: #{tpu_custom_call.1} parent=1 // pred_check_branch
      %422 = sbr.rel (0) target = $region41
    $region40: #{tpu_custom_call.1} parent=1 // pred_region
      _
    $region41: #{tpu_custom_call.1} parent=1 // pred_fallthru
      _
    %423 = vsyncpa [#allocation3], 1
    %424 = vsyncpa [#allocation5], 1

</llo_original>
